<compile_context>
chip_gen: v6e
topology: v6e:2x2x1
jax: 0.10.0
libtpu: 0.0.40
codegen_flags: <defaults>
</compile_context>

<pallas_src>
import functools

import jax
import jax.numpy as jnp
import numpy as np
from jax.experimental import pallas as pl
from jax.experimental.pallas import tpu as pltpu


# ----------------------------- helpers --------------------------------------

def _round_up(x, m):
    return (x + m - 1) // m * m


def _vmem_capacity_bytes():
    try:
        return int(pltpu.get_tpu_info().vmem_capacity_bytes)
    except Exception:
        return 64 * 1024 * 1024          # conservative fallback: v7x per-TC VMEM


def _chip_budgets():
    """(working-set budget, vmem_limit_bytes, max batch tile) per chip generation."""
    cap = _vmem_capacity_bytes()
    if cap >= 128 * 1024 * 1024:         # v5e / v6e: 128 MiB physical VMEM
        return 24 * 1024 * 1024, 64 * 1024 * 1024, 1024
    return 12 * 1024 * 1024, 32 * 1024 * 1024, 512   # v7x: 64 MiB physical


def _pick_tile_b(batch, d_in, n_pad, budget, max_tile):
    """Largest multiple-of-16 batch tile fitting the budget, preferring >=2 grid steps."""
    # Weight (bf16) + bias (f32) blocks: constant index_map, but the pipeliner still
    # allocates double buffers -> count them twice (review correctness concern).
    fixed = 2 * (d_in * n_pad * 2 + n_pad * 4)
    # Double-buffered per-row traffic: f32 x tile + f32 logits tile + f32 stats tile.
    per_row = 2 * (d_in * 4 + n_pad * 4 + 128 * 4)
    t = (budget - fixed) // max(per_row, 1)
    t = max(16, min(max_tile, (t // 16) * 16))
    if batch > t:
        return t                          # grid >= 2 automatically
    # Small batch: pick a tile that still yields >=2 grid steps (v7x megacore)
    # while keeping row padding below 16.
    half = _round_up(-(-batch // 2), 16)
    if batch > half:
        return min(half, t)
    return min(_round_up(batch, 16), t)


# ----------------------------- Pallas kernels ------------------------------

def _bernoulli_fwd_kernel(x_ref, w_ref, b_ref, logits_ref, stats_ref, *, n_valid):
    # Cast x -> bf16 in VMEM (free VPU slot); MXU matmul with f32 accumulation.
    x = x_ref[...].astype(jnp.bfloat16)
    l = jnp.dot(x, w_ref[...], preferred_element_type=jnp.float32)
    l = l + b_ref[...]                                   # (TILE_B, N_pad) f32

    # softplus first, then sigmoid recovered with a single extra exp:
    #   sp = log(1 + e^l),  p = sigmoid(l) = e^(l - sp)
    sp = jnp.maximum(l, 0.0) + jnp.log1p(jnp.exp(-jnp.abs(l)))
    p = jnp.exp(l - sp)

    logits_ref[...] = l

    # Mask zero-padded action columns out of the per-row reductions.
    col = jax.lax.broadcasted_iota(jnp.int32, l.shape, 1)
    valid = col < n_valid
    ent_sum = jnp.sum(jnp.where(valid, sp - l * p, 0.0), axis=-1, keepdims=True)
    sp_sum = jnp.sum(jnp.where(valid, sp, 0.0), axis=-1, keepdims=True)

    # Lane-dense 128-wide stats tile (unmasked stores):
    #   lane 0 = sum_j entropy, lanes >=1 = sum_j softplus (log_probs reads lane 1).
    lane = jax.lax.broadcasted_iota(jnp.int32, stats_ref.shape, 1)
    stats_ref[...] = jnp.where(lane == 0, ent_sum, sp_sum)


def _log_probs_kernel(logits_ref, actions_ref, stats_ref, out_ref):
    # Bernoulli(logits=l).log_prob(a) summed over actions:
    #   sum_j a*l - sum_j softplus(l); softplus-sum precomputed in the forward
    #   kernel (pad columns of logits/actions are exactly 0 -> no mask needed).
    a = actions_ref[...].astype(jnp.float32)
    al = jnp.sum(a * logits_ref[...], axis=-1, keepdims=True)
    lp = al - stats_ref[:, 1:2]                          # softplus sum lives in lane 1
    out_ref[...] = jnp.broadcast_to(lp, out_ref.shape)   # lane-dense unmasked store


# ----------------------------- wrappers -------------------------------------

def bernoulli_forward_pallas(x, w_bf, b, n_out):
    """Fused linear + distribution statistics. Returns padded logits + stats tile."""
    batch, d_in = x.shape
    n_pad = w_bf.shape[1]
    budget, vmem_limit, max_tile = _chip_budgets()
    tile_b = _pick_tile_b(batch, d_in, n_pad, budget, max_tile)
    b_pad = _round_up(batch, tile_b)

    x_p = x if b_pad == batch else jnp.pad(x, ((0, b_pad - batch), (0, 0)))

    kernel = functools.partial(_bernoulli_fwd_kernel, n_valid=n_out)
    logits, stats = pl.pallas_call(
        kernel,
        out_shape=(
            jax.ShapeDtypeStruct((b_pad, n_pad), jnp.float32),
            jax.ShapeDtypeStruct((b_pad, 128), jnp.float32),
        ),
        grid=(b_pad // tile_b,),
        in_specs=[
            pl.BlockSpec((tile_b, d_in), lambda i: (i, 0)),
            pl.BlockSpec((d_in, n_pad), lambda i: (0, 0)),
            pl.BlockSpec((1, n_pad), lambda i: (0, 0)),
        ],
        out_specs=(
            pl.BlockSpec((tile_b, n_pad), lambda i: (i, 0)),
            pl.BlockSpec((tile_b, 128), lambda i: (i, 0)),
        ),
        compiler_params=pltpu.CompilerParams(
            dimension_semantics=("parallel",),
            vmem_limit_bytes=vmem_limit),
    )(x_p, w_bf, b)
    return logits, stats, tile_b


def log_probs_pallas(logits_pad, actions, stats_pad, batch, n_out, tile_b):
    b_pad, n_pad = logits_pad.shape
    _, vmem_limit, _ = _chip_budgets()
    # actions are 0/1 -> exact in bf16; halves this kernel's second-largest read.
    a = jnp.asarray(actions, jnp.bfloat16)
    a = jnp.pad(a, ((0, b_pad - batch), (0, n_pad - n_out)))
    out = pl.pallas_call(
        _log_probs_kernel,
        out_shape=jax.ShapeDtypeStruct((b_pad, 128), jnp.float32),
        grid=(b_pad // tile_b,),
        in_specs=[
            pl.BlockSpec((tile_b, n_pad), lambda i: (i, 0)),
            pl.BlockSpec((tile_b, n_pad), lambda i: (i, 0)),
            pl.BlockSpec((tile_b, 128), lambda i: (i, 0)),
        ],
        out_specs=pl.BlockSpec((tile_b, 128), lambda i: (i, 0)),
        compiler_params=pltpu.CompilerParams(
            dimension_semantics=("parallel",),
            vmem_limit_bytes=vmem_limit),
    )(logits_pad, a, stats_pad)
    return out[:batch, :1]                                # [B, 1]


class FixedBernoulliPallas:
    """Mirrors FixedBernoulli's log_probs / entropy / mode semantics.
    Heavy stats come from the fused forward kernel; everything else is lazily
    derived from the cached logits on first access (no eager HBM slice copies)."""

    def __init__(self, logits_pad, stats_pad, batch, n_out, tile_b):
        self._logits_pad = logits_pad                     # padded, reused by log_probs
        self._stats_pad = stats_pad                       # lane0=entropy, lane1=softplus sum
        self._batch = batch
        self._n_out = n_out
        self._tile_b = tile_b
        self._logits = None
        self._probs = None
        self._mode = None
        self._entropy = None

    @property
    def logits(self):
        if self._logits is None:
            self._logits = self._logits_pad[:self._batch, :self._n_out]
        return self._logits                               # [B, N]

    @property
    def probs(self):
        if self._probs is None:
            self._probs = jax.nn.sigmoid(self.logits)     # tiny elementwise op, lazy
        return self._probs                                # [B, N]

    def mode(self):
        if self._mode is None:
            # torch.gt(probs, 0.5).float() == (logits > 0), no sigmoid needed
            self._mode = (self.logits > 0).astype(jnp.float32)
        return self._mode                                 # [B, N]

    def entropy(self):
        if self._entropy is None:
            self._entropy = self._stats_pad[:self._batch, 0]
        return self._entropy                              # [B]

    def log_probs(self, actions):
        return log_probs_pallas(self._logits_pad, actions, self._stats_pad,
                                self._batch, self._n_out, self._tile_b)  # [B, 1]

    # TODO(synk): sampling (torch.distributions.Bernoulli.sample) is not part of
    # the forward spec; if needed, implement with pltpu.prng_seed/prng_random_bits.


class BernoulliPallas:
    """Pallas version of the PyTorch `Bernoulli` module (orthogonal init, gain=0.01)."""

    def __init__(self, num_inputs, num_outputs, gain=0.01, key=None):
        if key is None:
            key = jax.random.PRNGKey(0)
        # orthogonal init of the [num_outputs, num_inputs] weight, bias = 0
        w = jax.nn.initializers.orthogonal(scale=gain)(
            key, (num_outputs, num_inputs), jnp.float32)
        self.n_out = num_outputs
        self.n_pad = _round_up(num_outputs, 128)          # lane-dense output width
        w_t = jnp.asarray(w).T                            # [D_in, D_out]
        # zero-padded, bf16 weights for the MXU (padded once at init, not per call)
        self.w_bf = jnp.pad(
            w_t, ((0, 0), (0, self.n_pad - num_outputs))).astype(jnp.bfloat16)
        self.b = jnp.zeros((1, self.n_pad), jnp.float32)

    def __call__(self, x):
        logits, stats, tile_b = bernoulli_forward_pallas(
            x, self.w_bf, self.b, self.n_out)
        return FixedBernoulliPallas(logits, stats, x.shape[0], self.n_out, tile_b)


# ----------------------------- demo / check ---------------------------------

if __name__ == "__main__":
    B, D_IN, D_OUT = 4, 32, 8

    key = jax.random.PRNGKey(0)
    kx, ka, kw = jax.random.split(key, 3)
    x = jax.random.normal(kx, (B, D_IN), jnp.float32)
    actions = jax.random.bernoulli(ka, 0.5, (B, D_OUT)).astype(jnp.float32)

    model = BernoulliPallas(D_IN, D_OUT, gain=0.01, key=kw)
    dist = model(x)

    logits = jax.block_until_ready(dist.logits)
    logp = jax.block_until_ready(dist.log_probs(actions))
    ent = jax.block_until_ready(dist.entropy())
    mode = jax.block_until_ready(dist.mode())
    probs = jax.block_until_ready(dist.probs)

    # pure-JAX reference (apply the same bf16 rounding to the matmul operands)
    xr = x.astype(jnp.bfloat16).astype(jnp.float32)
    wr = model.w_bf[:, :D_OUT].astype(jnp.float32)
    ref_logits = xr @ wr                                  # bias is zero
    ref_p = jax.nn.sigmoid(ref_logits)
    ref_sp = jax.nn.softplus(ref_logits)
    ref_logp = jnp.sum(actions * ref_logits - ref_sp, axis=-1, keepdims=True)
    ref_ent = jnp.sum(ref_sp - ref_logits * ref_p, axis=-1)
    ref_mode = (ref_logits > 0).astype(jnp.float32)

    np.testing.assert_allclose(np.asarray(logits), np.asarray(ref_logits),
                               rtol=1e-4, atol=1e-5)
    np.testing.assert_allclose(np.asarray(probs), np.asarray(ref_p),
                               rtol=1e-4, atol=1e-5)
    np.testing.assert_allclose(np.asarray(logp), np.asarray(ref_logp),
                               rtol=1e-4, atol=1e-4)
    np.testing.assert_allclose(np.asarray(ent), np.asarray(ref_ent),
                               rtol=1e-4, atol=1e-4)
    np.testing.assert_allclose(np.asarray(mode), np.asarray(ref_mode),
                               rtol=0, atol=0)

    assert logits.shape == (B, D_OUT)
    assert probs.shape == (B, D_OUT)
    assert logp.shape == (B, 1)
    assert ent.shape == (B,)
    assert mode.shape == (B, D_OUT)
    print("KERNEL_OK")
</pallas_src>

<mosaic_0001>
module attributes {stable_mosaic.version = 11 : i64} {
  func.func @_bernoulli_fwd_kernel(%arg0: i32, %arg1: memref<16x32xf32, #tpu.memory_space<vmem>>, %arg2: memref<32x128xbf16, #tpu.memory_space<vmem>>, %arg3: memref<1x128xf32, #tpu.memory_space<vmem>>, %arg4: memref<16x128xf32, #tpu.memory_space<vmem>>, %arg5: memref<16x128xf32, #tpu.memory_space<vmem>>) attributes {dimension_semantics = [#tpu.dimension_semantics<parallel>], iteration_bounds = array<i64: 1>, scalar_prefetch = 0 : i64, scratch_operands = 0 : i64, tpu.core_type = #tpu.core_type<tc>, window_params = [{transform_indices = @transform_0, window_bounds = array<i64: 16, 32>}, {pipeline_mode = #tpu.pipeline_mode<synchronous>, transform_indices = @transform_1, window_bounds = array<i64: 32, 128>}, {pipeline_mode = #tpu.pipeline_mode<synchronous>, transform_indices = @transform_2, window_bounds = array<i64: 1, 128>}, {transform_indices = @transform_3, window_bounds = array<i64: 16, 128>}, {transform_indices = @transform_4, window_bounds = array<i64: 16, 128>}]} {
    %c0 = arith.constant 0 : index
    %c0_0 = arith.constant 0 : index
    %0 = vector.load %arg1[%c0, %c0_0] : memref<16x32xf32, #tpu.memory_space<vmem>>, vector<16x32xf32>
    %1 = arith.truncf %0 : vector<16x32xf32> to vector<16x32xbf16>
    %c0_1 = arith.constant 0 : index
    %c0_2 = arith.constant 0 : index
    %2 = vector.load %arg2[%c0_1, %c0_2] : memref<32x128xbf16, #tpu.memory_space<vmem>>, vector<32x128xbf16>
    %cst = arith.constant dense<0.000000e+00> : vector<16x128xf32>
    %3 = tpu.matmul %1, %2, %cst {dimension_numbers = #tpu.dot_dimension_numbers<[1], [0], [0], [1], [0, 0, 1, 1], [], []>} : vector<16x32xbf16>, vector<32x128xbf16>, vector<16x128xf32> -> vector<16x128xf32>
    %c0_3 = arith.constant 0 : index
    %c0_4 = arith.constant 0 : index
    %4 = vector.load %arg3[%c0_3, %c0_4] : memref<1x128xf32, #tpu.memory_space<vmem>>, vector<1x128xf32>
    %5 = vector.broadcast %4 : vector<1x128xf32> to vector<16x128xf32>
    %6 = arith.addf %3, %5 : vector<16x128xf32>
    %cst_5 = arith.constant 0.000000e+00 : f32
    %7 = vector.broadcast %cst_5 : f32 to vector<16x128xf32>
    %8 = arith.maximumf %6, %7 : vector<16x128xf32>
    %9 = math.absf %6 : vector<16x128xf32>
    %cst_6 = arith.constant 0.000000e+00 : f32
    %10 = vector.broadcast %cst_6 : f32 to vector<16x128xf32>
    %11 = arith.subf %10, %9 : vector<16x128xf32>
    %12 = math.exp %11 : vector<16x128xf32>
    %13 = math.log1p %12 : vector<16x128xf32>
    %14 = arith.addf %8, %13 : vector<16x128xf32>
    %15 = arith.subf %6, %14 : vector<16x128xf32>
    %16 = math.exp %15 : vector<16x128xf32>
    %c0_7 = arith.constant 0 : index
    %c0_8 = arith.constant 0 : index
    %17 = vector.load %arg4[%c0_7, %c0_8] : memref<16x128xf32, #tpu.memory_space<vmem>>, vector<16x128xf32>
    tpu.vector_store %arg4[%c0_7, %c0_8], %6 {strides = array<i32>} : memref<16x128xf32, #tpu.memory_space<vmem>>, vector<16x128xf32>,
    %18 = tpu.iota {dimensions = array<i32: 1>} : vector<16x128xi32>
    %c8_i32 = arith.constant 8 : i32
    %19 = vector.broadcast %c8_i32 : i32 to vector<16x128xi32>
    %20 = arith.cmpi slt, %18, %19 : vector<16x128xi32>
    %21 = arith.mulf %6, %16 : vector<16x128xf32>
    %22 = arith.subf %14, %21 : vector<16x128xf32>
    %cst_9 = arith.constant 0.000000e+00 : f32
    %23 = vector.broadcast %cst_9 : f32 to vector<16x128xf32>
    %24 = arith.select %20, %22, %23 : vector<16x128xi1>, vector<16x128xf32>
    %cst_10 = arith.constant dense<0.000000e+00> : vector<16xf32>
    %25 = vector.multi_reduction <add>, %24, %cst_10 [1] : vector<16x128xf32> to vector<16xf32>
    %26 = vector.shape_cast %25 : vector<16xf32> to vector<16x1xf32>
    %cst_11 = arith.constant 0.000000e+00 : f32
    %27 = vector.broadcast %cst_11 : f32 to vector<16x128xf32>
    %28 = arith.select %20, %14, %27 : vector<16x128xi1>, vector<16x128xf32>
    %cst_12 = arith.constant dense<0.000000e+00> : vector<16xf32>
    %29 = vector.multi_reduction <add>, %28, %cst_12 [1] : vector<16x128xf32> to vector<16xf32>
    %30 = vector.shape_cast %29 : vector<16xf32> to vector<16x1xf32>
    %31 = tpu.iota {dimensions = array<i32: 1>} : vector<16x128xi32>
    %c0_i32 = arith.constant 0 : i32
    %32 = vector.broadcast %c0_i32 : i32 to vector<16x128xi32>
    %33 = arith.cmpi eq, %31, %32 : vector<16x128xi32>
    %34 = vector.shape_cast %26 : vector<16x1xf32> to vector<16x1xf32>
    %35 = vector.broadcast %34 : vector<16x1xf32> to vector<16x128xf32>
    %36 = vector.shape_cast %30 : vector<16x1xf32> to vector<16x1xf32>
    %37 = vector.broadcast %36 : vector<16x1xf32> to vector<16x128xf32>
    %38 = arith.select %33, %35, %37 : vector<16x128xi1>, vector<16x128xf32>
    %c0_13 = arith.constant 0 : index
    %c0_14 = arith.constant 0 : index
    %39 = vector.load %arg5[%c0_13, %c0_14] : memref<16x128xf32, #tpu.memory_space<vmem>>, vector<16x128xf32>
    tpu.vector_store %arg5[%c0_13, %c0_14], %38 {strides = array<i32>} : memref<16x128xf32, #tpu.memory_space<vmem>>, vector<16x128xf32>,
    return
  }
  func.func @transform_0(%arg0: i32) -> (i32, i32) {
    %c0_i32 = arith.constant 0 : i32
    %c0_i32_0 = arith.constant 0 : i32
    return %arg0, %c0_i32 : i32, i32
  }
  func.func @transform_1(%arg0: i32) -> (i32, i32) {
    %c0_i32 = arith.constant 0 : i32
    %c0_i32_0 = arith.constant 0 : i32
    %c0_i32_1 = arith.constant 0 : i32
    return %c0_i32, %c0_i32_0 : i32, i32
  }
  func.func @transform_2(%arg0: i32) -> (i32, i32) {
    %c0_i32 = arith.constant 0 : i32
    %c0_i32_0 = arith.constant 0 : i32
    %c0_i32_1 = arith.constant 0 : i32
    return %c0_i32, %c0_i32_0 : i32, i32
  }
  func.func @transform_3(%arg0: i32) -> (i32, i32) {
    %c0_i32 = arith.constant 0 : i32
    %c0_i32_0 = arith.constant 0 : i32
    return %arg0, %c0_i32 : i32, i32
  }
  func.func @transform_4(%arg0: i32) -> (i32, i32) {
    %c0_i32 = arith.constant 0 : i32
    %c0_i32_0 = arith.constant 0 : i32
    return %arg0, %c0_i32 : i32, i32
  }
}

</mosaic_0001>

<llo_original>
// kernel: tpu_custom_call.1
$region0: #{tpu_custom_call.1}
  #allocation0 [shape = 'u32[]', space=smem, size = 0x4, offset = 0x4, fixed_abs, tag = 'smem constant byte address 0x4 - core index']
  #allocation1 [shape = 'u32[144,128]{1,0:T(1,128)}', space=vmem, size = 0x12000, scoped, tag = 'internal scratch']
  %s0 = inlined_call_operand.hbm [shape: f32[16,32], index: 0, kind: input, shape index: {}]
  %s1 = inlined_call_operand.hbm [shape: bf16[32,128], index: 1, kind: input, shape index: {}]
  %s2 = inlined_call_operand.vmem [shape: f32[1,128], index: 2, kind: input, shape index: {}]
  %s3 = inlined_call_operand.hbm [shape: f32[16,128], index: 3, kind: output, shape index: {0}]
  %s4 = inlined_call_operand.hbm [shape: f32[16,128], index: 4, kind: output, shape index: {1}]
  %5 = xla_tuple %s3, %s4
  %s6 = sld [smem:[#allocation0]]
  $region38: #{tpu_custom_call.1} parent=0
    _
  %s8 = ssub.s32 1, %s6
  %s9 = scalar_select 0, %s8, %s6
  $region1: #{tpu_custom_call.1} parent=0
    #allocation2 [shape = 'u8[8192]{0}', space=vmem, size = 0x2000, scoped, tag = 'input window, operand 0, single buffered']
    #allocation3 [shape = 's32[1]{0}', space=sflag, size = 0x4, scoped, tag = 'scoped memory for tpu_custom_call.1']
    #allocation4 [shape = 's32[1]{0}', space=sflag, size = 0x4, scoped, tag = 'scoped memory for tpu_custom_call.1']
    #allocation5 [shape = 'u8[8192]{0}', space=vmem, size = 0x2000, scoped, tag = 'input window, operand 1, single buffered']
    #allocation6 [shape = 's32[1]{0}', space=sflag, size = 0x4, scoped, tag = 'scoped memory for tpu_custom_call.1']
    #allocation7 [shape = 'u8[8192]{0}', space=vmem, size = 0x2000, scoped, tag = 'output window, operand 0, single buffered']
    #allocation8 [shape = 'u8[8192]{0}', space=vmem, size = 0x2000, scoped, tag = 'output window, operand 1, single buffered']
    #allocation9 [shape = 's32[1]{0}', space=sflag, size = 0x4, scoped, tag = 'scoped memory for tpu_custom_call.1']
    %10 = vsyncpa [#allocation3], 0
    %11 = vsyncpa [#allocation6], 0
    %12 = vsyncpa [#allocation4], 0
    %13 = vsyncpa [#allocation9], 0
    // Predicated region
    $region2: #{tpu_custom_call.1} parent=1 // pred_check
      _
    $region3: #{tpu_custom_call.1} parent=1 // pred_check_branch
      %15 = sbr.rel (0) target = $region5
    $region4: #{tpu_custom_call.1} parent=1 // pred_region
      %s17 = ssub.s32 256, 256
      %18 = vsyncadd [#allocation3], %s17
      %s19 = sshll.u32 [#allocation2], 4
      %s20 = int_to_ptr.vmem [resolvable:$true] %s19
      %25 = dma.hbm_to_vmem [thread:$0]  %s0, 256, %s20, [#allocation3], 128, 128, 8
    $region5: #{tpu_custom_call.1} parent=1 // pred_fallthru
      _
    // Predicated region
    $region6: #{tpu_custom_call.1} parent=1 // pred_check
      _
    $region7: #{tpu_custom_call.1} parent=1 // pred_check_branch
      %27 = sbr.rel (0) target = $region9
    $region8: #{tpu_custom_call.1} parent=1 // pred_region
      %s29 = ssub.s32 256, 256
      %30 = vsyncadd [#allocation6], %s29
      %s31 = sshll.u32 [#allocation5], 4
      %s32 = int_to_ptr.vmem [resolvable:$true] %s31
      %37 = dma.hbm_to_vmem [thread:$0]  %s1, 256, %s32, [#allocation6], 64, 64, 4
    $region9: #{tpu_custom_call.1} parent=1 // pred_fallthru
      _
    // Predicated region
    $region10: #{tpu_custom_call.1} parent=1 // pred_check
      _
    $region11: #{tpu_custom_call.1} parent=1 // pred_check_branch
      %39 = sbr.rel (0) target = $region13
    $region12: #{tpu_custom_call.1} parent=1 // pred_region
      _
    $region13: #{tpu_custom_call.1} parent=1 // pred_fallthru
      _
    // Predicated region
    $region14: #{tpu_custom_call.1} parent=1 // pred_check
      _
    $region15: #{tpu_custom_call.1} parent=1 // pred_check_branch
      %41 = sbr.rel (0) target = $region17
    $region16: #{tpu_custom_call.1} parent=1 // pred_region
      %42 = dma.done [#allocation3], 256
    $region17: #{tpu_custom_call.1} parent=1 // pred_fallthru
      _
    // Predicated region
    $region18: #{tpu_custom_call.1} parent=1 // pred_check
      _
    $region19: #{tpu_custom_call.1} parent=1 // pred_check_branch
      %44 = sbr.rel (0) target = $region21
    $region20: #{tpu_custom_call.1} parent=1 // pred_region
      %45 = dma.done [#allocation6], 256
    $region21: #{tpu_custom_call.1} parent=1 // pred_fallthru
      _
    %v47 = vld [vmem:[#allocation2] sm:$0xff]
    %v48 = vld [vmem:[#allocation2 + $0x8] sm:$0xff]
    %v49 = vpack.c.bf16 %v48, %v47
    %v50 = vld [vmem:[#allocation5] sm:$0xf]
    %v51 = vld [vmem:[#allocation5 + $0x4] sm:$0xf]
    %v52 = vld [vmem:[#allocation5 + $0x8] sm:$0xf]
    %v53 = vld [vmem:[#allocation5 + $0xc] sm:$0xf]
    %v54 = vld [vmem:[%s2] sm:$0x1]
    %v56 = vlaneseq
    %v57 = vshrl.u32 %v56, 7
    %v58 = vsub.s32 0, %v57
    %v59 = vrot.slane %v54, %v58
    %v65 = vunpack.c.l.b16 %v50
    %v66 = vunpack.c.l.b16 %v51
    %v67 = vunpack.c.l.b16 %v52
    %v68 = vunpack.c.l.b16 %v53
    %v69 = vpack.c.b16 %v66, %v65
    %v70 = vpack.c.b16 %v68, %v67
    %vm73 = vcmask 261120
    %v75 = vsel %vm73, %v49, 0
    %77 = vmatprep.subr.bf16.mxu0 0
    %78 = vmatpush1.bf16.msra.mxu0 0
    %79 = vmatprep.subr.bf16.mxu0 0
    %80 = vmatpush1.bf16.msra.mxu0 0
    %81 = vmatprep.subr.bf16.mxu0 0
    %82 = vmatpush1.bf16.msra.mxu0 0
    %83 = vmatprep.subr.bf16.mxu0 0
    %84 = vmatpush1.bf16.msra.mxu0 0
    %85 = vmatprep.subr.bf16.mxu0 0
    %86 = vmatpush1.bf16.msra.mxu0 0
    %87 = vmatprep.subr.bf16.mxu0 0
    %88 = vmatpush1.bf16.msra.mxu0 0
    %89 = vmatprep.subr.bf16.mxu0 0
    %90 = vmatpush1.bf16.msra.mxu0 %v70
    %91 = vmatprep.subr.bf16.mxu0 0
    %92 = vmatpush1.bf16.msra.mxu0 %v69
    %93 = vmatprep.subr.bf16.mxu0 0
    %94 = vmatpush2.bf16.msra.mxu0 0
    %95 = vmatprep.subr.bf16.mxu0 0
    %96 = vmatpush2.bf16.msra.mxu0 0
    %97 = vmatprep.subr.bf16.mxu0 0
    %98 = vmatpush2.bf16.msra.mxu0 0
    %99 = vmatprep.subr.bf16.mxu0 0
    %100 = vmatpush2.bf16.msra.mxu0 0
    %101 = vmatprep.subr.bf16.mxu0 0
    %102 = vmatpush2.bf16.msra.mxu0 0
    %103 = vmatprep.subr.bf16.mxu0 0
    %104 = vmatpush2.bf16.msra.mxu0 0
    %105 = vmatprep.subr.bf16.mxu0 0
    %106 = vmatpush2.bf16.msra.mxu0 0
    %107 = vmatprep.subr.bf16.mxu0 0
    %108 = vmatpush2.bf16.msra.mxu0 0
    %109 = vmatprep.mubr.bf16.mxu0 0
    %110 = vmatmul.mubr.bf16.gmra.mxu0 %v75
    %v111 = vpop.f32.mrf.mxu0
    %v112 = vadd.f32 %v59, %v111
    %v113 = vpop.f32.mrf.mxu0
    %v114 = vpop.f32.mrf.mxu0
    %v115 = vadd.f32 %v59, %v114
    %v116 = vpop.f32.mrf.mxu0
    %117 = vdwg.mxu0
    %v118 = vmax.f32 %v112, 0.0
    %v119 = vmax.f32 %v115, 0.0
    %v120 = vand.u32 2147483647, %v112
    %v121 = vand.u32 2147483647, %v115
    %v122 = vsub.f32 0.0, %v120
    %v123 = vsub.f32 0.0, %v121
    %v124 = vmul.f32 %v122, 1.442695
    %v125 = vpow.pop %v124
    %v126 = vmul.f32 %v123, 1.442695
    %v127 = vpow.pop %v126
    %v128 = vadd.f32 %v125, 1.0
    %v129 = vlog2.pop %v128
    %v130 = vmul.f32 %v129, 0.6931472
    %v131 = vmul.f32 -0.5, %v125
    %v132 = vadd.f32 %v131, 1.0
    %v133 = vmul.f32 %v132, %v125
    %v134 = vand.u32 2147483647, %v125
    %vm135 = vcmp.lt.f32.partialorder %v134, 0.0004427343
    %v136 = vsel %vm135, %v133, %v130
    %v137 = vadd.f32 %v127, 1.0
    %v138 = vlog2.pop %v137
    %v139 = vmul.f32 %v138, 0.6931472
    %v140 = vmul.f32 -0.5, %v127
    %v141 = vadd.f32 %v140, 1.0
    %v142 = vmul.f32 %v141, %v127
    %v143 = vand.u32 2147483647, %v127
    %vm144 = vcmp.lt.f32.partialorder %v143, 0.0004427343
    %v145 = vsel %vm144, %v142, %v139
    %v146 = vadd.f32 %v118, %v136
    %v147 = vadd.f32 %v119, %v145
    %v148 = vsub.f32 %v112, %v146
    %v149 = vsub.f32 %v115, %v147
    %v150 = vmul.f32 %v148, 1.442695
    %v151 = vpow.pop %v150
    %v152 = vmul.f32 %v149, 1.442695
    %v153 = vpow.pop %v152
    %154 = vst [vmem:[#allocation7] sm:$0xff] %v112
    %155 = vst [vmem:[#allocation7 + $0x8] sm:$0xff] %v115
    %v156 = vlaneseq
    %v157 = vand.u32 %v156, 127
    %vm158 = vcmp.lt.s32.totalorder %v157, 8
    %v159 = vmul.f32 %v112, %v151
    %v160 = vmul.f32 %v115, %v153
    %v161 = vsub.f32 %v146, %v159
    %v162 = vsub.f32 %v147, %v160
    %v163 = vsel %vm158, %v161, 0.0
    %v164 = vsel %vm158, %v162, 0.0
    %165 = vadd.xlane.f32.xlu0 %v163
    %v166 = vpop.xlane.xlu0 %165
    %167 = vadd.xlane.f32.xlu0 %v164
    %v168 = vpop.xlane.xlu0 %167
    %v169 = vsel %vm158, %v146, 0.0
    %v170 = vsel %vm158, %v147, 0.0
    %171 = vadd.xlane.f32.xlu0 %v169
    %v172 = vpop.xlane.xlu0 %171
    %173 = vadd.xlane.f32.xlu0 %v170
    %v174 = vpop.xlane.xlu0 %173
    %vm175 = vcmp.eq.s32.totalorder %v157, 0
    %v176 = vsel %vm175, %v166, %v172
    %v177 = vsel %vm175, %v168, %v174
    %178 = vst [vmem:[#allocation8] sm:$0xff] %v176
    %179 = vst [vmem:[#allocation8 + $0x8] sm:$0xff] %v177
    // Predicated region
    $region22: #{tpu_custom_call.1} parent=1 // pred_check
      _
    $region23: #{tpu_custom_call.1} parent=1 // pred_check_branch
      %181 = sbr.rel (0) target = $region25
    $region24: #{tpu_custom_call.1} parent=1 // pred_region
      %s183 = ssub.s32 256, 256
      %184 = vsyncadd [#allocation4], %s183
      %s185 = sshll.u32 [#allocation7], 4
      %s186 = int_to_ptr.vmem [resolvable:$true] %s185
      %191 = dma.vmem_to_hbm [thread:$0]  %s186, 256, %s3, [#allocation4], 128, 128, 8
    $region25: #{tpu_custom_call.1} parent=1 // pred_fallthru
      _
    // Predicated region
    $region26: #{tpu_custom_call.1} parent=1 // pred_check
      _
    $region27: #{tpu_custom_call.1} parent=1 // pred_check_branch
      %193 = sbr.rel (0) target = $region29
    $region28: #{tpu_custom_call.1} parent=1 // pred_region
      %s195 = ssub.s32 256, 256
      %196 = vsyncadd [#allocation9], %s195
      %s197 = sshll.u32 [#allocation8], 4
      %s198 = int_to_ptr.vmem [resolvable:$true] %s197
      %203 = dma.vmem_to_hbm [thread:$0]  %s198, 256, %s4, [#allocation9], 128, 128, 8
    $region29: #{tpu_custom_call.1} parent=1 // pred_fallthru
      _
    // Predicated region
    $region30: #{tpu_custom_call.1} parent=1 // pred_check
      _
    $region31: #{tpu_custom_call.1} parent=1 // pred_check_branch
      %205 = sbr.rel (0) target = $region33
    $region32: #{tpu_custom_call.1} parent=1 // pred_region
      %206 = dma.done [#allocation4], 256
    $region33: #{tpu_custom_call.1} parent=1 // pred_fallthru
      _
    // Predicated region
    $region34: #{tpu_custom_call.1} parent=1 // pred_check
      _
    $region35: #{tpu_custom_call.1} parent=1 // pred_check_branch
      %208 = sbr.rel (0) target = $region37
    $region36: #{tpu_custom_call.1} parent=1 // pred_region
      %209 = dma.done [#allocation9], 256
    $region37: #{tpu_custom_call.1} parent=1 // pred_fallthru
      _
    %210 = vsyncpa [#allocation3], 1
    %211 = vsyncpa [#allocation6], 1
    %212 = vsyncpa [#allocation4], 1
    %213 = vsyncpa [#allocation9], 1

</llo_original>
